<compile_context>
chip_gen: v5e
topology: v5e:2x2
jax: 0.10.0
libtpu: 0.0.40
codegen_flags: <defaults>
</compile_context>

<pallas_src>
import functools
import math

import jax
import jax.numpy as jnp
from jax.experimental import pallas as pl
from jax.experimental.pallas import tpu as pltpu


# ----------------------------- Pallas kernels -------------------------------

def qkv_kernel(x_ref, w_ref, q_ref, k_ref, v_ref, *, n_head, d_head):
    """Fused Q/K/V projection for one batch row-slab; head-major bf16 outputs."""
    x = x_ref[0].astype(jnp.bfloat16)                                  # [S, H]
    for n in range(n_head):                                            # static unroll
        qkv = jnp.dot(x, w_ref[n], preferred_element_type=jnp.float32)  # [S, 3D]
        q_ref[n, 0] = qkv[:, :d_head].astype(jnp.bfloat16)
        k_ref[n, 0] = qkv[:, d_head:2 * d_head].astype(jnp.bfloat16)
        v_ref[n, 0] = qkv[:, 2 * d_head:].astype(jnp.bfloat16)


def r_proj_kernel(pos_ref, rw_ref, kr_ref, *, n_head):
    """Positional-key projection kr[n, p, :] = pos_emb[p] @ r_w[n] (bf16 out)."""
    pe = pos_ref[...].astype(jnp.bfloat16)                             # [P, H]
    for n in range(n_head):
        kr_ref[n] = jnp.dot(pe, rw_ref[n],
                            preferred_element_type=jnp.float32).astype(jnp.bfloat16)


def attn_kernel(q_ref, k_ref, v_ref, kr_ref, rwb_ref, rrb_ref, rsb_ref,
                seg0_ref, seg1_ref, segq_ref, segk_ref, amask_ref,
                ow_ref, res_ref, g_ref, b_ref, o_ref, bd_scr, ctx_scr,
                *, n_head, seq_len, scale, row_blk):
    """Fused XLNet relative attention (all heads) + out-proj + residual + LN for
    one batch element."""
    S = seq_len
    D = q_ref.shape[-1]
    QB = row_blk
    L = S + QB - 1
    nt = (((1,), (1,)), ((), ()))        # A[.., d] . B[.., d]  (A @ B^T)
    nk = (((1,), (0,)), ((), ()))        # plain A @ B

    # --- per-batch mask tensors (shared across heads) -------------------------
    is_diff = (segq_ref[0] != segk_ref[0]).astype(jnp.float32)         # [S, S]
    row_i = jax.lax.broadcasted_iota(jnp.int32, (S, S), 0)
    col_j = jax.lax.broadcasted_iota(jnp.int32, (S, S), 1)
    # pad keys masked except the diagonal (HF non_tgt_mask)
    amask = jnp.where(row_i == col_j, 0.0, amask_ref[0])               # [S, S]

    for n in range(n_head):                                            # static unroll
        q = q_ref[n, 0].astype(jnp.float32)                            # [S, D]
        k = k_ref[n, 0]                                                # [S, D] bf16
        v = v_ref[n, 0]
        rwb = rwb_ref[n]                                               # [1, D] f32
        rrb = rrb_ref[n]
        rsb = rsb_ref[n]

        # --- content score AC = (q + r_w_bias) @ k^T --------------------------
        ac = jax.lax.dot_general((q + rwb).astype(jnp.bfloat16), k, nt,
                                 preferred_element_type=jnp.float32)   # [S, S]

        # --- segment score EF (same / different segment embedding) ------------
        qs = (q + rsb).astype(jnp.bfloat16)
        seg_same = jax.lax.dot_general(qs, seg0_ref[n].astype(jnp.bfloat16), nt,
                                       preferred_element_type=jnp.float32)  # [S, 1]
        seg_diff = jax.lax.dot_general(qs, seg1_ref[n].astype(jnp.bfloat16), nt,
                                       preferred_element_type=jnp.float32)  # [S, 1]
        ef = seg_same + is_diff * (seg_diff - seg_same)                 # [S, S]

        # --- positional score BD with the rel_shift folded in ------------------
        # bd[i, j] = (q[i] + r_r_bias) . kr[S - i + j]  (== XLNet rel_shift_bnij)
        # One MXU matmul per block of QB query rows against the union kr window,
        # then static per-row lane slices (shift within a block is static).
        def bd_block(i0):
            q_rows = (q_ref[n, 0, pl.ds(i0, QB), :].astype(jnp.float32) + rrb
                      ).astype(jnp.bfloat16)                            # [QB, D]
            kr_win = kr_ref[n, pl.ds(S - i0 - (QB - 1), L), :]          # [L, D]
            blk = jax.lax.dot_general(q_rows, kr_win, nt,
                                      preferred_element_type=jnp.float32)  # [QB, L]
            for g in range(QB):                                         # static unroll
                c0 = QB - 1 - g
                bd_scr[pl.ds(i0 + g, 1), :] = blk[g:g + 1, c0:c0 + S]

        nb = S // QB
        if nb <= 4:                                   # small S: fully static indexing
            for bi in range(nb):
                bd_block(bi * QB)
        else:
            def body(bi, carry):
                bd_block(pl.multiple_of(bi * QB, QB))
                return carry
            jax.lax.fori_loop(0, nb, body, 0)

        # --- softmax + P@V ------------------------------------------------------
        score = (ac + bd_scr[...] + ef) * scale + amask
        m = jnp.max(score, axis=-1, keepdims=True)
        p = jnp.exp(score - m)
        prob = (p * pl.reciprocal(jnp.sum(p, axis=-1, keepdims=True), approx=True)
                ).astype(jnp.bfloat16)
        ctx_scr[:, n * D:(n + 1) * D] = jax.lax.dot_general(
            prob, v, nk, preferred_element_type=jnp.float32)            # [S, D]

    # --- output projection over concatenated heads + residual + LayerNorm ------
    attn_out = jax.lax.dot_general(ctx_scr[...].astype(jnp.bfloat16), ow_ref[...],
                                   nk, preferred_element_type=jnp.float32)  # [S, H]
    x = attn_out + res_ref[0]
    mu = jnp.mean(x, axis=-1, keepdims=True)
    var = jnp.mean(jnp.square(x - mu), axis=-1, keepdims=True)
    o_ref[0] = (x - mu) * jax.lax.rsqrt(var + 1e-12) * g_ref[...] + b_ref[...]


def ffn_ln_kernel(x_ref, w1_ref, b1_ref, w2_ref, b2_ref, g_ref, b_ref, o_ref):
    """Fused position-wise FFN (gelu) + residual + LayerNorm (row tile)."""
    x = x_ref[...]                                                      # [TM, H] f32
    u = jnp.dot(x.astype(jnp.bfloat16), w1_ref[...],
                preferred_element_type=jnp.float32) + b1_ref[...]
    # TODO(synk): HF XLNet uses erf-gelu; tanh approximation used here (EUP tanh).
    u = 0.5 * u * (1.0 + jnp.tanh(0.7978845608028654 * (u + 0.044715 * u * u * u)))
    y = jnp.dot(u.astype(jnp.bfloat16), w2_ref[...],
                preferred_element_type=jnp.float32) + b2_ref[...]
    z = y + x
    mu = jnp.mean(z, axis=-1, keepdims=True)
    var = jnp.mean(jnp.square(z - mu), axis=-1, keepdims=True)
    o_ref[...] = (z - mu) * jax.lax.rsqrt(var + 1e-12) * g_ref[...] + b_ref[...]


def pooler_kernel(x_ref, w_ref, b_ref, o_ref):
    o_ref[...] = jnp.tanh(
        jnp.dot(x_ref[...].astype(jnp.bfloat16), w_ref[...],
                preferred_element_type=jnp.float32) + b_ref[...])


# ----------------------------- pallas_call wrappers --------------------------

def _cparams(*sem):
    return pltpu.CompilerParams(dimension_semantics=tuple(sem),
                                vmem_limit_bytes=32 * 1024 * 1024)


def qkv_proj(h_bsd, qkv_w):
    B, S, H = h_bsd.shape
    N, _, D3 = qkv_w.shape
    D = D3 // 3
    out_spec = pl.BlockSpec((N, 1, S, D), lambda b: (0, b, 0, 0))
    out_sd = jax.ShapeDtypeStruct((N, B, S, D), jnp.bfloat16)
    return pl.pallas_call(
        functools.partial(qkv_kernel, n_head=N, d_head=D),
        grid=(B,),
        in_specs=[pl.BlockSpec((1, S, H), lambda b: (b, 0, 0)),
                  pl.BlockSpec((N, H, D3), lambda b: (0, 0, 0))],       # resident weights
        out_specs=(out_spec, out_spec, out_spec),
        out_shape=(out_sd, out_sd, out_sd),
        compiler_params=_cparams("parallel"),
    )(h_bsd, qkv_w)


def r_proj(pos_emb, rw):
    P, H = pos_emb.shape
    N, _, D = rw.shape
    return pl.pallas_call(
        functools.partial(r_proj_kernel, n_head=N),
        grid=(1,),
        in_specs=[pl.BlockSpec((P, H), lambda i: (0, 0)),
                  pl.BlockSpec((N, H, D), lambda i: (0, 0, 0))],
        out_specs=pl.BlockSpec((N, P, D), lambda i: (0, 0, 0)),
        out_shape=jax.ShapeDtypeStruct((N, P, D), jnp.bfloat16),
        compiler_params=_cparams("arbitrary"),
    )(pos_emb, rw)


def attn_out_ln(q, k, v, kr, rwb, rrb, rsb, seg0, seg1, segq, segk, amask,
                o_w, resid, ln_g, ln_b):
    N, B, S, D = q.shape
    P = kr.shape[1]
    H = o_w.shape[1]
    row_blk = min(8, S)
    assert S % row_blk == 0

    qkv_spec = pl.BlockSpec((N, 1, S, D), lambda b: (0, b, 0, 0))

    def head_full(r, c):
        return pl.BlockSpec((N, r, c), lambda b: (0, 0, 0))

    def per_b(r, c):
        return pl.BlockSpec((1, r, c), lambda b: (b, 0, 0))

    return pl.pallas_call(
        functools.partial(attn_kernel, n_head=N, seq_len=S,
                          scale=1.0 / math.sqrt(D), row_blk=row_blk),
        grid=(B,),
        in_specs=[qkv_spec, qkv_spec, qkv_spec,
                  head_full(P, D),                                   # kr
                  head_full(1, D), head_full(1, D), head_full(1, D), # r_w / r_r / r_s bias
                  head_full(1, D), head_full(1, D),                  # seg emb same / diff
                  per_b(S, 1), per_b(1, S), per_b(1, S),             # seg ids col/row, pad mask
                  pl.BlockSpec((N * D, H), lambda b: (0, 0)),        # output proj weight
                  per_b(S, H),                                       # residual
                  pl.BlockSpec((1, H), lambda b: (0, 0)),            # LN gamma
                  pl.BlockSpec((1, H), lambda b: (0, 0))],           # LN beta
        out_specs=per_b(S, H),
        out_shape=jax.ShapeDtypeStruct((B, S, H), jnp.float32),
        scratch_shapes=[pltpu.VMEM((S, S), jnp.float32),             # BD scores
                        pltpu.VMEM((S, N * D), jnp.float32)],        # concatenated context
        compiler_params=_cparams("parallel"),
    )(q, k, v, kr, rwb, rrb, rsb, seg0, seg1, segq, segk, amask,
      o_w, resid, ln_g, ln_b)


def ffn_ln(x, w1, b1, w2, b2, g, bb, tm):
    M, H = x.shape
    F = w1.shape[1]

    def full(shape):
        return pl.BlockSpec(shape, lambda r, _s=len(shape): (0,) * _s)

    return pl.pallas_call(
        ffn_ln_kernel,
        grid=(M // tm,),
        in_specs=[pl.BlockSpec((tm, H), lambda r: (r, 0)),
                  full((H, F)), full((1, F)), full((F, H)), full((1, H)),
                  full((1, H)), full((1, H))],
        out_specs=pl.BlockSpec((tm, H), lambda r: (r, 0)),
        out_shape=jax.ShapeDtypeStruct((M, H), jnp.float32),
        compiler_params=_cparams("parallel"),
    )(x, w1, b1, w2, b2, g, bb)


def pooler(x, w, b):
    Bx, H = x.shape
    return pl.pallas_call(
        pooler_kernel,
        grid=(1,),
        in_specs=[pl.BlockSpec((Bx, H), lambda i: (0, 0)),
                  pl.BlockSpec((H, H), lambda i: (0, 0)),
                  pl.BlockSpec((1, H), lambda i: (0, 0))],
        out_specs=pl.BlockSpec((Bx, H), lambda i: (0, 0)),
        out_shape=jax.ShapeDtypeStruct((Bx, H), jnp.float32),
        compiler_params=_cparams("arbitrary"),
    )(x, w, b)


# ----------------------------- JAX glue --------------------------------------

def relative_positional_encoding(qlen, klen, d_model):
    pos_seq = jnp.arange(klen, -qlen, -1.0, dtype=jnp.float32)        # length qlen+klen
    inv_freq = 1.0 / (10000.0 ** (jnp.arange(0, d_model, 2, dtype=jnp.float32) / d_model))
    sinusoid = pos_seq[:, None] * inv_freq[None, :]
    return jnp.concatenate([jnp.sin(sinusoid), jnp.cos(sinusoid)], axis=-1)  # [q+k, H]


def init_xlnet_params(key, vocab_size, d_model, n_head, d_head, d_inner, n_layer):
    kit = iter(jax.random.split(key, 4 + 12 * n_layer))

    def nrm(shape, dtype=jnp.float32):
        return (0.02 * jax.random.normal(next(kit), shape, jnp.float32)).astype(dtype)

    params = {
        "word_emb": nrm((vocab_size, d_model)),
        "pool_w": nrm((d_model, d_model), jnp.bfloat16),
        "pool_b": jnp.zeros((1, d_model), jnp.float32),
        "layers": [],
    }
    for _ in range(n_layer):
        params["layers"].append({
            # head-major weights, bf16 for the MXU; Q/K/V stacked along the last dim
            "qkv_w": nrm((n_head, d_model, 3 * d_head), jnp.bfloat16),
            "r_w": nrm((n_head, d_model, d_head), jnp.bfloat16),
            "o_w": nrm((n_head * d_head, d_model), jnp.bfloat16),
            "r_w_bias": nrm((n_head, 1, d_head)),
            "r_r_bias": nrm((n_head, 1, d_head)),
            "r_s_bias": nrm((n_head, 1, d_head)),
            "seg_emb_same": nrm((n_head, 1, d_head)),
            "seg_emb_diff": nrm((n_head, 1, d_head)),
            "ln1_g": jnp.ones((1, d_model), jnp.float32),
            "ln1_b": jnp.zeros((1, d_model), jnp.float32),
            "ff_w1": nrm((d_model, d_inner), jnp.bfloat16),
            "ff_b1": jnp.zeros((1, d_inner), jnp.float32),
            "ff_w2": nrm((d_inner, d_model), jnp.bfloat16),
            "ff_b2": jnp.zeros((1, d_model), jnp.float32),
            "ln2_g": jnp.ones((1, d_model), jnp.float32),
            "ln2_b": jnp.zeros((1, d_model), jnp.float32),
        })
    return params


def xlnet_forward(params, input_ids, segment_ids, padding_mask):
    B, S = input_ids.shape
    H = params["word_emb"].shape[1]
    M = B * S
    tm = M if M <= 256 else 256
    assert M % tm == 0

    # TODO(synk): embedding lookup (gather) has no clean Pallas equivalent here;
    #             done with jnp.take.  Dropout layers are identity in eval mode.
    h = jnp.take(params["word_emb"], input_ids.reshape(-1), axis=0)      # [M, H]
    pos_emb = relative_positional_encoding(S, S, H)                       # [2S, H]

    # tiny per-batch tensors; the [S, S] diff / non-target masks are built in-kernel
    segq = segment_ids.astype(jnp.float32).reshape(B, S, 1)
    segk = segment_ids.astype(jnp.float32).reshape(B, 1, S)
    amask = (-1e30 * (1.0 - padding_mask.astype(jnp.float32))).reshape(B, 1, S)

    h_bsd = h.reshape(B, S, H)
    for layer in params["layers"]:
        q, k, v = qkv_proj(h_bsd, layer["qkv_w"])                         # [N, B, S, D] bf16
        kr = r_proj(pos_emb, layer["r_w"])                                # [N, 2S, D] bf16
        h1 = attn_out_ln(q, k, v, kr,
                         layer["r_w_bias"], layer["r_r_bias"], layer["r_s_bias"],
                         layer["seg_emb_same"], layer["seg_emb_diff"],
                         segq, segk, amask, layer["o_w"], h_bsd,
                         layer["ln1_g"], layer["ln1_b"])                  # [B, S, H]
        h2 = ffn_ln(h1.reshape(M, H), layer["ff_w1"], layer["ff_b1"],
                    layer["ff_w2"], layer["ff_b2"],
                    layer["ln2_g"], layer["ln2_b"], tm)                   # [M, H]
        h_bsd = h2.reshape(B, S, H)

    sequence_output = h_bsd
    # SequenceSummary pooler (XLNet config): take last token, Linear, tanh
    # (summary_last_dropout set to 0 in FARM's XLNet.load)
    pooled_output = pooler(sequence_output[:, -1, :], params["pool_w"], params["pool_b"])
    return sequence_output, pooled_output


# ----------------------------- main -------------------------------------------

if __name__ == "__main__":
    B, S = 2, 8
    d_model, n_head, d_head, d_inner, n_layer = 32, 4, 8, 64, 2
    vocab_size = 50

    key = jax.random.PRNGKey(0)
    kp, ki = jax.random.split(key, 2)

    params = init_xlnet_params(kp, vocab_size, d_model, n_head, d_head, d_inner, n_layer)

    input_ids = jax.random.randint(ki, (B, S), 0, vocab_size, dtype=jnp.int32)
    segment_ids = jnp.concatenate(
        [jnp.zeros((B, S // 2), jnp.int32), jnp.ones((B, S // 2), jnp.int32)], axis=1)
    padding_mask = jnp.ones((B, S), jnp.int32).at[:, -2:].set(0)   # last 2 tokens are pad

    sequence_output, pooled_output = xlnet_forward(
        params, input_ids, segment_ids, padding_mask)
    jax.block_until_ready((sequence_output, pooled_output))

    assert sequence_output.shape == (B, S, d_model)
    assert pooled_output.shape == (B, d_model)
    print("KERNEL_OK")
</pallas_src>

<mosaic_0001>
module attributes {stable_mosaic.version = 11 : i64} {
  func.func @qkv_kernel(%arg0: i32, %arg1: memref<1x8x32xf32, #tpu.memory_space<vmem>>, %arg2: memref<4x32x24xbf16, #tpu.memory_space<vmem>>, %arg3: memref<4x1x8x8xbf16, #tpu.memory_space<vmem>>, %arg4: memref<4x1x8x8xbf16, #tpu.memory_space<vmem>>, %arg5: memref<4x1x8x8xbf16, #tpu.memory_space<vmem>>) attributes {dimension_semantics = [#tpu.dimension_semantics<parallel>], iteration_bounds = array<i64: 2>, scalar_prefetch = 0 : i64, scratch_operands = 0 : i64, tpu.core_type = #tpu.core_type<tc>, window_params = [{transform_indices = @transform_0, window_bounds = array<i64: 1, 8, 32>}, {pipeline_mode = #tpu.pipeline_mode<synchronous>, transform_indices = @transform_1, window_bounds = array<i64: 4, 32, 24>}, {transform_indices = @transform_2, window_bounds = array<i64: 4, 1, 8, 8>}, {transform_indices = @transform_3, window_bounds = array<i64: 4, 1, 8, 8>}, {transform_indices = @transform_4, window_bounds = array<i64: 4, 1, 8, 8>}]} {
    %c0 = arith.constant 0 : index
    %c0_0 = arith.constant 0 : index
    %c0_1 = arith.constant 0 : index
    %0 = vector.load %arg1[%c0, %c0_0, %c0_1] : memref<1x8x32xf32, #tpu.memory_space<vmem>>, vector<1x8x32xf32>
    %1 = vector.shape_cast %0 : vector<1x8x32xf32> to vector<8x32xf32>
    %2 = arith.truncf %1 : vector<8x32xf32> to vector<8x32xbf16>
    %c0_2 = arith.constant 0 : index
    %c0_3 = arith.constant 0 : index
    %c0_4 = arith.constant 0 : index
    %3 = vector.load %arg2[%c0_2, %c0_3, %c0_4] : memref<4x32x24xbf16, #tpu.memory_space<vmem>>, vector<1x32x24xbf16>
    %4 = vector.shape_cast %3 : vector<1x32x24xbf16> to vector<32x24xbf16>
    %cst = arith.constant dense<0.000000e+00> : vector<8x24xf32>
    %5 = tpu.matmul %2, %4, %cst {dimension_numbers = #tpu.dot_dimension_numbers<[1], [0], [0], [1], [0, 0, 1, 1], [], []>} : vector<8x32xbf16>, vector<32x24xbf16>, vector<8x24xf32> -> vector<8x24xf32>
    %6 = vector.extract_strided_slice %5 {offsets = [0, 0], sizes = [8, 8], strides = [1, 1]} : vector<8x24xf32> to vector<8x8xf32>
    %7 = arith.truncf %6 : vector<8x8xf32> to vector<8x8xbf16>
    %c0_5 = arith.constant 0 : index
    %c0_6 = arith.constant 0 : index
    %c0_7 = arith.constant 0 : index
    %c0_8 = arith.constant 0 : index
    %8 = vector.load %arg3[%c0_5, %c0_6, %c0_7, %c0_8] : memref<4x1x8x8xbf16, #tpu.memory_space<vmem>>, vector<1x1x8x8xbf16>
    %9 = vector.shape_cast %8 : vector<1x1x8x8xbf16> to vector<8x8xbf16>
    %10 = vector.shape_cast %7 : vector<8x8xbf16> to vector<1x1x8x8xbf16>
    tpu.vector_store %arg3[%c0_5, %c0_6, %c0_7, %c0_8], %10 {strides = array<i32>} : memref<4x1x8x8xbf16, #tpu.memory_space<vmem>>, vector<1x1x8x8xbf16>,
    %11 = vector.extract_strided_slice %5 {offsets = [0, 8], sizes = [8, 8], strides = [1, 1]} : vector<8x24xf32> to vector<8x8xf32>
    %12 = arith.truncf %11 : vector<8x8xf32> to vector<8x8xbf16>
    %c0_9 = arith.constant 0 : index
    %c0_10 = arith.constant 0 : index
    %c0_11 = arith.constant 0 : index
    %c0_12 = arith.constant 0 : index
    %13 = vector.load %arg4[%c0_9, %c0_10, %c0_11, %c0_12] : memref<4x1x8x8xbf16, #tpu.memory_space<vmem>>, vector<1x1x8x8xbf16>
    %14 = vector.shape_cast %13 : vector<1x1x8x8xbf16> to vector<8x8xbf16>
    %15 = vector.shape_cast %12 : vector<8x8xbf16> to vector<1x1x8x8xbf16>
    tpu.vector_store %arg4[%c0_9, %c0_10, %c0_11, %c0_12], %15 {strides = array<i32>} : memref<4x1x8x8xbf16, #tpu.memory_space<vmem>>, vector<1x1x8x8xbf16>,
    %16 = vector.extract_strided_slice %5 {offsets = [0, 16], sizes = [8, 8], strides = [1, 1]} : vector<8x24xf32> to vector<8x8xf32>
    %17 = arith.truncf %16 : vector<8x8xf32> to vector<8x8xbf16>
    %c0_13 = arith.constant 0 : index
    %c0_14 = arith.constant 0 : index
    %c0_15 = arith.constant 0 : index
    %c0_16 = arith.constant 0 : index
    %18 = vector.load %arg5[%c0_13, %c0_14, %c0_15, %c0_16] : memref<4x1x8x8xbf16, #tpu.memory_space<vmem>>, vector<1x1x8x8xbf16>
    %19 = vector.shape_cast %18 : vector<1x1x8x8xbf16> to vector<8x8xbf16>
    %20 = vector.shape_cast %17 : vector<8x8xbf16> to vector<1x1x8x8xbf16>
    tpu.vector_store %arg5[%c0_13, %c0_14, %c0_15, %c0_16], %20 {strides = array<i32>} : memref<4x1x8x8xbf16, #tpu.memory_space<vmem>>, vector<1x1x8x8xbf16>,
    %c1 = arith.constant 1 : index
    %c0_17 = arith.constant 0 : index
    %c0_18 = arith.constant 0 : index
    %21 = vector.load %arg2[%c1, %c0_17, %c0_18] : memref<4x32x24xbf16, #tpu.memory_space<vmem>>, vector<1x32x24xbf16>
    %22 = vector.shape_cast %21 : vector<1x32x24xbf16> to vector<32x24xbf16>
    %cst_19 = arith.constant dense<0.000000e+00> : vector<8x24xf32>
    %23 = tpu.matmul %2, %22, %cst_19 {dimension_numbers = #tpu.dot_dimension_numbers<[1], [0], [0], [1], [0, 0, 1, 1], [], []>} : vector<8x32xbf16>, vector<32x24xbf16>, vector<8x24xf32> -> vector<8x24xf32>
    %24 = vector.extract_strided_slice %23 {offsets = [0, 0], sizes = [8, 8], strides = [1, 1]} : vector<8x24xf32> to vector<8x8xf32>
    %25 = arith.truncf %24 : vector<8x8xf32> to vector<8x8xbf16>
    %c1_20 = arith.constant 1 : index
    %c0_21 = arith.constant 0 : index
    %c0_22 = arith.constant 0 : index
    %c0_23 = arith.constant 0 : index
    %26 = vector.load %arg3[%c1_20, %c0_21, %c0_22, %c0_23] : memref<4x1x8x8xbf16, #tpu.memory_space<vmem>>, vector<1x1x8x8xbf16>
    %27 = vector.shape_cast %26 : vector<1x1x8x8xbf16> to vector<8x8xbf16>
    %28 = vector.shape_cast %25 : vector<8x8xbf16> to vector<1x1x8x8xbf16>
    tpu.vector_store %arg3[%c1_20, %c0_21, %c0_22, %c0_23], %28 {strides = array<i32>} : memref<4x1x8x8xbf16, #tpu.memory_space<vmem>>, vector<1x1x8x8xbf16>,
    %29 = vector.extract_strided_slice %23 {offsets = [0, 8], sizes = [8, 8], strides = [1, 1]} : vector<8x24xf32> to vector<8x8xf32>
    %30 = arith.truncf %29 : vector<8x8xf32> to vector<8x8xbf16>
    %c1_24 = arith.constant 1 : index
    %c0_25 = arith.constant 0 : index
    %c0_26 = arith.constant 0 : index
    %c0_27 = arith.constant 0 : index
    %31 = vector.load %arg4[%c1_24, %c0_25, %c0_26, %c0_27] : memref<4x1x8x8xbf16, #tpu.memory_space<vmem>>, vector<1x1x8x8xbf16>
    %32 = vector.shape_cast %31 : vector<1x1x8x8xbf16> to vector<8x8xbf16>
    %33 = vector.shape_cast %30 : vector<8x8xbf16> to vector<1x1x8x8xbf16>
    tpu.vector_store %arg4[%c1_24, %c0_25, %c0_26, %c0_27], %33 {strides = array<i32>} : memref<4x1x8x8xbf16, #tpu.memory_space<vmem>>, vector<1x1x8x8xbf16>,
    %34 = vector.extract_strided_slice %23 {offsets = [0, 16], sizes = [8, 8], strides = [1, 1]} : vector<8x24xf32> to vector<8x8xf32>
    %35 = arith.truncf %34 : vector<8x8xf32> to vector<8x8xbf16>
    %c1_28 = arith.constant 1 : index
    %c0_29 = arith.constant 0 : index
    %c0_30 = arith.constant 0 : index
    %c0_31 = arith.constant 0 : index
    %36 = vector.load %arg5[%c1_28, %c0_29, %c0_30, %c0_31] : memref<4x1x8x8xbf16, #tpu.memory_space<vmem>>, vector<1x1x8x8xbf16>
    %37 = vector.shape_cast %36 : vector<1x1x8x8xbf16> to vector<8x8xbf16>
    %38 = vector.shape_cast %35 : vector<8x8xbf16> to vector<1x1x8x8xbf16>
    tpu.vector_store %arg5[%c1_28, %c0_29, %c0_30, %c0_31], %38 {strides = array<i32>} : memref<4x1x8x8xbf16, #tpu.memory_space<vmem>>, vector<1x1x8x8xbf16>,
    %c2 = arith.constant 2 : index
    %c0_32 = arith.constant 0 : index
    %c0_33 = arith.constant 0 : index
    %39 = vector.load %arg2[%c2, %c0_32, %c0_33] : memref<4x32x24xbf16, #tpu.memory_space<vmem>>, vector<1x32x24xbf16>
    %40 = vector.shape_cast %39 : vector<1x32x24xbf16> to vector<32x24xbf16>
    %cst_34 = arith.constant dense<0.000000e+00> : vector<8x24xf32>
    %41 = tpu.matmul %2, %40, %cst_34 {dimension_numbers = #tpu.dot_dimension_numbers<[1], [0], [0], [1], [0, 0, 1, 1], [], []>} : vector<8x32xbf16>, vector<32x24xbf16>, vector<8x24xf32> -> vector<8x24xf32>
    %42 = vector.extract_strided_slice %41 {offsets = [0, 0], sizes = [8, 8], strides = [1, 1]} : vector<8x24xf32> to vector<8x8xf32>
    %43 = arith.truncf %42 : vector<8x8xf32> to vector<8x8xbf16>
    %c2_35 = arith.constant 2 : index
    %c0_36 = arith.constant 0 : index
    %c0_37 = arith.constant 0 : index
    %c0_38 = arith.constant 0 : index
    %44 = vector.load %arg3[%c2_35, %c0_36, %c0_37, %c0_38] : memref<4x1x8x8xbf16, #tpu.memory_space<vmem>>, vector<1x1x8x8xbf16>
    %45 = vector.shape_cast %44 : vector<1x1x8x8xbf16> to vector<8x8xbf16>
    %46 = vector.shape_cast %43 : vector<8x8xbf16> to vector<1x1x8x8xbf16>
    tpu.vector_store %arg3[%c2_35, %c0_36, %c0_37, %c0_38], %46 {strides = array<i32>} : memref<4x1x8x8xbf16, #tpu.memory_space<vmem>>, vector<1x1x8x8xbf16>,
    %47 = vector.extract_strided_slice %41 {offsets = [0, 8], sizes = [8, 8], strides = [1, 1]} : vector<8x24xf32> to vector<8x8xf32>
    %48 = arith.truncf %47 : vector<8x8xf32> to vector<8x8xbf16>
    %c2_39 = arith.constant 2 : index
    %c0_40 = arith.constant 0 : index
    %c0_41 = arith.constant 0 : index
    %c0_42 = arith.constant 0 : index
    %49 = vector.load %arg4[%c2_39, %c0_40, %c0_41, %c0_42] : memref<4x1x8x8xbf16, #tpu.memory_space<vmem>>, vector<1x1x8x8xbf16>
    %50 = vector.shape_cast %49 : vector<1x1x8x8xbf16> to vector<8x8xbf16>
    %51 = vector.shape_cast %48 : vector<8x8xbf16> to vector<1x1x8x8xbf16>
    tpu.vector_store %arg4[%c2_39, %c0_40, %c0_41, %c0_42], %51 {strides = array<i32>} : memref<4x1x8x8xbf16, #tpu.memory_space<vmem>>, vector<1x1x8x8xbf16>,
    %52 = vector.extract_strided_slice %41 {offsets = [0, 16], sizes = [8, 8], strides = [1, 1]} : vector<8x24xf32> to vector<8x8xf32>
    %53 = arith.truncf %52 : vector<8x8xf32> to vector<8x8xbf16>
    %c2_43 = arith.constant 2 : index
    %c0_44 = arith.constant 0 : index
    %c0_45 = arith.constant 0 : index
    %c0_46 = arith.constant 0 : index
    %54 = vector.load %arg5[%c2_43, %c0_44, %c0_45, %c0_46] : memref<4x1x8x8xbf16, #tpu.memory_space<vmem>>, vector<1x1x8x8xbf16>
    %55 = vector.shape_cast %54 : vector<1x1x8x8xbf16> to vector<8x8xbf16>
    %56 = vector.shape_cast %53 : vector<8x8xbf16> to vector<1x1x8x8xbf16>
    tpu.vector_store %arg5[%c2_43, %c0_44, %c0_45, %c0_46], %56 {strides = array<i32>} : memref<4x1x8x8xbf16, #tpu.memory_space<vmem>>, vector<1x1x8x8xbf16>,
    %c3 = arith.constant 3 : index
    %c0_47 = arith.constant 0 : index
    %c0_48 = arith.constant 0 : index
    %57 = vector.load %arg2[%c3, %c0_47, %c0_48] : memref<4x32x24xbf16, #tpu.memory_space<vmem>>, vector<1x32x24xbf16>
    %58 = vector.shape_cast %57 : vector<1x32x24xbf16> to vector<32x24xbf16>
    %cst_49 = arith.constant dense<0.000000e+00> : vector<8x24xf32>
    %59 = tpu.matmul %2, %58, %cst_49 {dimension_numbers = #tpu.dot_dimension_numbers<[1], [0], [0], [1], [0, 0, 1, 1], [], []>} : vector<8x32xbf16>, vector<32x24xbf16>, vector<8x24xf32> -> vector<8x24xf32>
    %60 = vector.extract_strided_slice %59 {offsets = [0, 0], sizes = [8, 8], strides = [1, 1]} : vector<8x24xf32> to vector<8x8xf32>
    %61 = arith.truncf %60 : vector<8x8xf32> to vector<8x8xbf16>
    %c3_50 = arith.constant 3 : index
    %c0_51 = arith.constant 0 : index
    %c0_52 = arith.constant 0 : index
    %c0_53 = arith.constant 0 : index
    %62 = vector.load %arg3[%c3_50, %c0_51, %c0_52, %c0_53] : memref<4x1x8x8xbf16, #tpu.memory_space<vmem>>, vector<1x1x8x8xbf16>
    %63 = vector.shape_cast %62 : vector<1x1x8x8xbf16> to vector<8x8xbf16>
    %64 = vector.shape_cast %61 : vector<8x8xbf16> to vector<1x1x8x8xbf16>
    tpu.vector_store %arg3[%c3_50, %c0_51, %c0_52, %c0_53], %64 {strides = array<i32>} : memref<4x1x8x8xbf16, #tpu.memory_space<vmem>>, vector<1x1x8x8xbf16>,
    %65 = vector.extract_strided_slice %59 {offsets = [0, 8], sizes = [8, 8], strides = [1, 1]} : vector<8x24xf32> to vector<8x8xf32>
    %66 = arith.truncf %65 : vector<8x8xf32> to vector<8x8xbf16>
    %c3_54 = arith.constant 3 : index
    %c0_55 = arith.constant 0 : index
    %c0_56 = arith.constant 0 : index
    %c0_57 = arith.constant 0 : index
    %67 = vector.load %arg4[%c3_54, %c0_55, %c0_56, %c0_57] : memref<4x1x8x8xbf16, #tpu.memory_space<vmem>>, vector<1x1x8x8xbf16>
    %68 = vector.shape_cast %67 : vector<1x1x8x8xbf16> to vector<8x8xbf16>
    %69 = vector.shape_cast %66 : vector<8x8xbf16> to vector<1x1x8x8xbf16>
    tpu.vector_store %arg4[%c3_54, %c0_55, %c0_56, %c0_57], %69 {strides = array<i32>} : memref<4x1x8x8xbf16, #tpu.memory_space<vmem>>, vector<1x1x8x8xbf16>,
    %70 = vector.extract_strided_slice %59 {offsets = [0, 16], sizes = [8, 8], strides = [1, 1]} : vector<8x24xf32> to vector<8x8xf32>
    %71 = arith.truncf %70 : vector<8x8xf32> to vector<8x8xbf16>
    %c3_58 = arith.constant 3 : index
    %c0_59 = arith.constant 0 : index
    %c0_60 = arith.constant 0 : index
    %c0_61 = arith.constant 0 : index
    %72 = vector.load %arg5[%c3_58, %c0_59, %c0_60, %c0_61] : memref<4x1x8x8xbf16, #tpu.memory_space<vmem>>, vector<1x1x8x8xbf16>
    %73 = vector.shape_cast %72 : vector<1x1x8x8xbf16> to vector<8x8xbf16>
    %74 = vector.shape_cast %71 : vector<8x8xbf16> to vector<1x1x8x8xbf16>
    tpu.vector_store %arg5[%c3_58, %c0_59, %c0_60, %c0_61], %74 {strides = array<i32>} : memref<4x1x8x8xbf16, #tpu.memory_space<vmem>>, vector<1x1x8x8xbf16>,
    return
  }
  func.func @transform_0(%arg0: i32) -> (i32, i32, i32) {
    %c0_i32 = arith.constant 0 : i32
    %c0_i32_0 = arith.constant 0 : i32
    %c0_i32_1 = arith.constant 0 : i32
    return %arg0, %c0_i32, %c0_i32_0 : i32, i32, i32
  }
  func.func @transform_1(%arg0: i32) -> (i32, i32, i32) {
    %c0_i32 = arith.constant 0 : i32
    %c0_i32_0 = arith.constant 0 : i32
    %c0_i32_1 = arith.constant 0 : i32
    %c0_i32_2 = arith.constant 0 : i32
    return %c0_i32, %c0_i32_0, %c0_i32_1 : i32, i32, i32
  }
  func.func @transform_2(%arg0: i32) -> (i32, i32, i32, i32) {
    %c0_i32 = arith.constant 0 : i32
    %c0_i32_0 = arith.constant 0 : i32
    %c0_i32_1 = arith.constant 0 : i32
    %c0_i32_2 = arith.constant 0 : i32
    return %c0_i32, %arg0, %c0_i32_0, %c0_i32_1 : i32, i32, i32, i32
  }
  func.func @transform_3(%arg0: i32) -> (i32, i32, i32, i32) {
    %c0_i32 = arith.constant 0 : i32
    %c0_i32_0 = arith.constant 0 : i32
    %c0_i32_1 = arith.constant 0 : i32
    %c0_i32_2 = arith.constant 0 : i32
    return %c0_i32, %arg0, %c0_i32_0, %c0_i32_1 : i32, i32, i32, i32
  }
  func.func @transform_4(%arg0: i32) -> (i32, i32, i32, i32) {
    %c0_i32 = arith.constant 0 : i32
    %c0_i32_0 = arith.constant 0 : i32
    %c0_i32_1 = arith.constant 0 : i32
    %c0_i32_2 = arith.constant 0 : i32
    return %c0_i32, %arg0, %c0_i32_0, %c0_i32_1 : i32, i32, i32, i32
  }
}

</mosaic_0001>

<llo_original>
// kernel: tpu_custom_call.1
$region0: #{tpu_custom_call.1}
  #allocation0 [shape = 'u32[]', space=smem, size = 0x4, offset = 0x4, fixed_abs, tag = 'smem constant byte address 0x4 - core index']
  #allocation1 [shape = 'u32[72,128]{1,0:T(1,128)}', space=vmem, size = 0x9000, scoped, tag = 'internal scratch']
  %s0 = inlined_call_operand.vmem [shape: f32[2,8,32], index: 0, kind: input, shape index: {}]
  %s1 = inlined_call_operand.vmem [shape: bf16[4,32,24], index: 1, kind: input, shape index: {}]
  %s2 = inlined_call_operand.hbm [shape: bf16[4,2,8,8], index: 2, kind: output, shape index: {0}]
  %s3 = inlined_call_operand.hbm [shape: bf16[4,2,8,8], index: 3, kind: output, shape index: {1}]
  %s4 = inlined_call_operand.hbm [shape: bf16[4,2,8,8], index: 4, kind: output, shape index: {2}]
  %5 = xla_tuple %s2, %s3, %s4
  %s6 = sld [smem:[#allocation0]]
  $region57: #{tpu_custom_call.1} parent=0
    _
  %s8 = ssub.s32 1, %s6
  %s9 = scalar_select 0, %s8, %s6
  $region1: #{tpu_custom_call.1} parent=0
    #allocation2 [shape = 'u8[16384]{0}', space=vmem, size = 0x4000, scoped, tag = 'output window, operand 0']
    #allocation3 [shape = 's32[2]{0}', space=sflag, size = 0x8, scoped, tag = 'scoped memory for tpu_custom_call.1']
    #allocation4 [shape = 'u8[16384]{0}', space=vmem, size = 0x4000, scoped, tag = 'output window, operand 1']
    #allocation5 [shape = 's32[2]{0}', space=sflag, size = 0x8, scoped, tag = 'scoped memory for tpu_custom_call.1']
    #allocation6 [shape = 'u8[16384]{0}', space=vmem, size = 0x4000, scoped, tag = 'output window, operand 2']
    %10 = vsyncpa [#allocation3], 0
    %s11 = scalar_lea.sflag [#allocation3], 1
    %12 = vsyncpa %s11, 0
    %13 = vsyncpa [#allocation5], 0
    %s14 = scalar_lea.sflag [#allocation5], 1
    %15 = vsyncpa %s14, 0
    loop: start=0, step=1, limit=4
    $region2: #{tpu_custom_call.1} parent=1 // loop_pre_header
      _
    $region3: #{tpu_custom_call.1} parent=1 // loop_header
      %s17 = sphi 0, %s21
      %p18 = scmp.ge.s32.totalorder %s17, 4
      %s27 = sphi 0, %s29
      %s30 = sphi 0, %s27
      %s31 = sphi 0, %s30
      %s47 = sphi 0, %s31
      %s51 = sphi 0, %s51
      %s53 = sphi 0, %s51
      %s54 = sphi 0, %s53
      %s68 = sphi 0, %s54
      %s74 = sphi 0, %s76
      %s77 = sphi 0, %s74
      %s78 = sphi 0, %s77
      %s94 = sphi 0, %s78
      %s100 = sphi 0, %s102
      %s103 = sphi 0, %s100
      %s104 = sphi 0, %s103
      %s120 = sphi 0, %s104
      %s126 = sphi 0, %s128
      %s129 = sphi 0, %s126
      %s130 = sphi 0, %s129
      %s146 = sphi 0, %s130
    $region4: #{tpu_custom_call.1} parent=1 // loop_header_branch
      %20 = sbr.rel (%p18) target = $region8
    $region5: #{tpu_custom_call.1} parent=1 // loop_body
      %s22 = ssub.s32 %s17, 1
      %s23 = ssub.s32 %s17, 2
      %s24 = sadd.s32 %s17, 1
      %s25 = ssub.s32 %s17, %s24
      %p26 = scmp.eq.s32.totalorder %s25, 0
      %s28 = sadd.s32 %s27, 1
      %s29 = scalar_select %p26, %s27, %s28
      %p32 = pneg %p26
      %p33 = scmp.eq.s32.totalorder %s17, 1
      %p34 = por %p32, %p33
      %p35 = scmp.ne.s32.totalorder %s27, %s30
      %p36 = scmp.eq.s32.totalorder %s17, 0
      %p37 = por %p35, %p36
      %p38 = scmp.ne.s32.totalorder %s27, %s30
      %p39 = scmp.eq.s32.totalorder %s22, 1
      %p40 = por %p38, %p39
      %p41 = scmp.ne.s32.totalorder %s30, %s31
      %p42 = scmp.eq.s32.totalorder %s22, 0
      %p43 = por %p41, %p42
      %p44 = scmp.ne.s32.totalorder %s30, %s31
      %p45 = scmp.eq.s32.totalorder %s23, 1
      %p46 = por %p44, %p45
      %p48 = scmp.ne.s32.totalorder %s31, %s47
      %p49 = scmp.eq.s32.totalorder %s23, 0
      %p50 = por %p48, %p49
      %s52 = sadd.s32 %s51, 1
      %p55 = scmp.eq.s32.totalorder %s17, 1
      %p56 = scmp.ne.s32.totalorder %s51, %s53
      %p57 = scmp.eq.s32.totalorder %s17, 0
      %p58 = por %p56, %p57
      %p59 = scmp.ne.s32.totalorder %s51, %s53
      %p60 = scmp.eq.s32.totalorder %s22, 1
      %p61 = por %p59, %p60
      %p62 = scmp.ne.s32.totalorder %s53, %s54
      %p63 = scmp.eq.s32.totalorder %s22, 0
      %p64 = por %p62, %p63
      %p65 = scmp.ne.s32.totalorder %s53, %s54
      %p66 = scmp.eq.s32.totalorder %s23, 1
      %p67 = por %p65, %p66
      %p69 = scmp.ne.s32.totalorder %s54, %s68
      %p70 = scmp.eq.s32.totalorder %s23, 0
      %p71 = por %p69, %p70
      %s72 = ssub.s32 %s17, %s24
      %p73 = scmp.eq.s32.totalorder %s72, 0
      %s75 = sadd.s32 %s74, 1
      %s76 = scalar_select %p73, %s74, %s75
      %p79 = pneg %p73
      %p80 = scmp.eq.s32.totalorder %s17, 1
      %p81 = por %p79, %p80
      %p82 = scmp.ne.s32.totalorder %s74, %s77
      %p83 = scmp.eq.s32.totalorder %s17, 0
      %p84 = por %p82, %p83
      %p85 = scmp.ne.s32.totalorder %s74, %s77
      %p86 = scmp.eq.s32.totalorder %s22, 1
      %p87 = por %p85, %p86
      %p88 = scmp.ne.s32.totalorder %s77, %s78
      %p89 = scmp.eq.s32.totalorder %s22, 0
      %p90 = por %p88, %p89
      %p91 = scmp.ne.s32.totalorder %s77, %s78
      %p92 = scmp.eq.s32.totalorder %s23, 1
      %p93 = por %p91, %p92
      %p95 = scmp.ne.s32.totalorder %s78, %s94
      %p96 = scmp.eq.s32.totalorder %s23, 0
      %p97 = por %p95, %p96
      %s98 = ssub.s32 %s17, %s24
      %p99 = scmp.eq.s32.totalorder %s98, 0
      %s101 = sadd.s32 %s100, 1
      %s102 = scalar_select %p99, %s100, %s101
      %p105 = pneg %p99
      %p106 = scmp.eq.s32.totalorder %s17, 1
      %p107 = por %p105, %p106
      %p108 = scmp.ne.s32.totalorder %s100, %s103
      %p109 = scmp.eq.s32.totalorder %s17, 0
      %p110 = por %p108, %p109
      %p111 = scmp.ne.s32.totalorder %s100, %s103
      %p112 = scmp.eq.s32.totalorder %s22, 1
      %p113 = por %p111, %p112
      %p114 = scmp.ne.s32.totalorder %s103, %s104
      %p115 = scmp.eq.s32.totalorder %s22, 0
      %p116 = por %p114, %p115
      %p117 = scmp.ne.s32.totalorder %s103, %s104
      %p118 = scmp.eq.s32.totalorder %s23, 1
      %p119 = por %p117, %p118
      %p121 = scmp.ne.s32.totalorder %s104, %s120
      %p122 = scmp.eq.s32.totalorder %s23, 0
      %p123 = por %p121, %p122
      %s124 = ssub.s32 %s17, %s24
      %p125 = scmp.eq.s32.totalorder %s124, 0
      %s127 = sadd.s32 %s126, 1
      %s128 = scalar_select %p125, %s126, %s127
      %p131 = pneg %p125
      %p132 = scmp.eq.s32.totalorder %s17, 1
      %p133 = por %p131, %p132
      %p134 = scmp.ne.s32.totalorder %s126, %s129
      %p135 = scmp.eq.s32.totalorder %s17, 0
      %p136 = por %p134, %p135
      %p137 = scmp.ne.s32.totalorder %s126, %s129
      %p138 = scmp.eq.s32.totalorder %s22, 1
      %p139 = por %p137, %p138
      %p140 = scmp.ne.s32.totalorder %s129, %s130
      %p141 = scmp.eq.s32.totalorder %s22, 0
      %p142 = por %p140, %p141
      %p143 = scmp.ne.s32.totalorder %s129, %s130
      %p144 = scmp.eq.s32.totalorder %s23, 1
      %p145 = por %p143, %p144
      %p147 = scmp.ne.s32.totalorder %s130, %s146
      %p148 = scmp.eq.s32.totalorder %s23, 0
      %p149 = por %p147, %p148
      %p150 = scmp.le.s32.totalorder 1, %s17
      %p151 = scmp.lt.s32.totalorder %s17, 3
      %p152 = pnand %p150, %p151
      %p153 = pneg %p152
      // Predicated region
      $region9: #{tpu_custom_call.1} parent=5 // pred_check
        _
      $region10: #{tpu_custom_call.1} parent=5 // pred_check_branch
        %155 = sbr.rel (%p152) target = $region12
      $region11: #{tpu_custom_call.1} parent=5 // pred_region
        %s156 = ssub.s32 %s17, 1
        // Predicated region
        $region13: #{tpu_custom_call.1} parent=11 // pred_check
          %p157 = pneg %p64
        $region14: #{tpu_custom_call.1} parent=11 // pred_check_branch
          %159 = sbr.rel (%p157) target = $region16
        $region15: #{tpu_custom_call.1} parent=11 // pred_region
          _
        $region16: #{tpu_custom_call.1} parent=11 // pred_fallthru
          _
      $region12: #{tpu_custom_call.1} parent=5 // pred_fallthru
        _
      %p160 = scmp.lt.s32.totalorder %s17, 2
      // Predicated region
      $region17: #{tpu_custom_call.1} parent=5 // pred_check
        %p161 = pneg %p160
      $region18: #{tpu_custom_call.1} parent=5 // pred_check_branch
        %163 = sbr.rel (%p161) target = $region20
      $region19: #{tpu_custom_call.1} parent=5 // pred_region
        // Predicated region
        $region21: #{tpu_custom_call.1} parent=19 // pred_check
          %p164 = pneg %p37
        $region22: #{tpu_custom_call.1} parent=19 // pred_check_branch
          %166 = sbr.rel (%p164) target = $region24
        $region23: #{tpu_custom_call.1} parent=19 // pred_region
          %p167 = scmp.lt.s32.totalorder %s17, 1
          %s168 = scalar_select %p167, %s17, 1
          %s169 = smul.addr %s168, 8
          %s170 = scalar_lea.vmem %s0, %s169
        $region24: #{tpu_custom_call.1} parent=19 // pred_fallthru
          _
      $region20: #{tpu_custom_call.1} parent=5 // pred_fallthru
        _
      %p171 = scmp.le.s32.totalorder 1, %s17
      %p172 = scmp.lt.s32.totalorder %s17, 3
      %p173 = pnand %p171, %p172
      %p174 = pneg %p173
      // Predicated region
      $region25: #{tpu_custom_call.1} parent=5 // pred_check
        _
      $region26: #{tpu_custom_call.1} parent=5 // pred_check_branch
        %176 = sbr.rel (%p173) target = $region28
      $region27: #{tpu_custom_call.1} parent=5 // pred_region
        %s177 = ssub.s32 %s17, 1
        %p178 = scmp.lt.s32.totalorder %s22, 1
        %s179 = scalar_select %p178, %s22, 1
        %s180 = smul.addr %s179, 8
        %s181 = scalar_lea.vmem %s0, %s180
        %p182 = pneg %p43
        %p183 = pneg %p40
        %p184 = pneg %p64
        %p185 = pneg %p61
        %p186 = pneg %p90
        %p187 = pneg %p87
        %s188 = sand.u32 %s77, 1
        %s189 = scalar_lea.sflag [#allocation3], %s188
        %s190 = sand.u32 %s77, 1
        %s191 = smul.addr %s190, 16
        %s192 = scalar_lea.vmem [#allocation2], %s191
        %p193 = pneg %p116
        %p194 = pneg %p113
        %s195 = sand.u32 %s22, 1
        %s196 = scalar_lea.sflag [#allocation5], %s195
        %s197 = sand.u32 %s103, 1
        %s198 = smul.addr %s197, 16
        %s199 = scalar_lea.vmem [#allocation4], %s198
        %p200 = pneg %p142
        %p201 = pneg %p139
        %s202 = sand.u32 %s22, 1
        %s203 = scalar_lea.sflag [#allocation5], %s202
        %s204 = sand.u32 %s129, 1
        %s205 = smul.addr %s204, 16
        %s206 = scalar_lea.vmem [#allocation6], %s205
        %p207 = scmp.lt.s32.totalorder %s22, 1
        %s208 = scalar_select %p207, %s22, 1
        %s209 = smul.addr %s208, 8
        %s210 = scalar_lea.vmem %s0, %s209
        %v212 = vld [vmem:[%s210] sm:$0xff]
        %v213 = vpack.c.bf16 %v212, %v212
        %v214 = vld [vmem:[%s1] sm:$0xf]
        %v215 = vld [vmem:[%s1 + $0x4] sm:$0xf]
        %v216 = vld [vmem:[%s1 + $0x8] sm:$0xf]
        %v217 = vld [vmem:[%s1 + $0xc] sm:$0xf]
        %v222 = vunpack.c.l.b16 %v214
        %v223 = vunpack.c.l.b16 %v215
        %v224 = vunpack.c.l.b16 %v216
        %v225 = vunpack.c.l.b16 %v217
        %v226 = vpack.c.b16 %v223, %v222
        %v227 = vpack.c.b16 %v225, %v224
        %vm230 = vcmask 261120
        %v232 = vsel %vm230, %v213, 0
        %234 = vmatpush.bf16.msra.mxu0 0
        %235 = vmatpush.bf16.msra.mxu0 0
        %236 = vmatpush.bf16.msra.mxu0 0
        %237 = vmatpush.bf16.msra.mxu0 0
        %238 = vmatpush.bf16.msra.mxu0 0
        %239 = vmatpush.bf16.msra.mxu0 0
        %240 = vmatpush.bf16.msra.mxu0 %v227
        %241 = vmatpush.bf16.msra.mxu0 %v226
        %242 = vmatmul.bf16.gmra.mxu0 %v232
        %v243 = vpop.f32.mrf.mxu0
        %v244 = vadd.f32 0.0, %v243
        %v245 = vpop.f32.mrf.mxu0
        %246 = vdwg.mxu0
        %v247 = vpack.c.bf16 %v244, %v244
        %vm248 = vcmask 60416
        %249 = vst.msk [vmem:[%s192] sm:$0xf] %vm248, %v247
        %251 = vrot.lane.b32.xlu0 %v247, 120
        %v252 = vpop.permute.xlu0 %251
        %254 = vst.msk [vmem:[%s199] sm:$0xf] %vm248, %v252
        %255 = vrot.lane.b32.xlu0 %v247, 112
        %v256 = vpop.permute.xlu0 %255
        %258 = vst.msk [vmem:[%s206] sm:$0xf] %vm248, %v256
        %s259 = scalar_lea.vmem %s1, 16
        %v260 = vld [vmem:[%s259] sm:$0xf]
        %v261 = vld [vmem:[%s259 + $0x4] sm:$0xf]
        %v262 = vld [vmem:[%s259 + $0x8] sm:$0xf]
        %v263 = vld [vmem:[%s259 + $0xc] sm:$0xf]
        %v268 = vunpack.c.l.b16 %v260
        %v269 = vunpack.c.l.b16 %v261
        %v270 = vunpack.c.l.b16 %v262
        %v271 = vunpack.c.l.b16 %v263
        %v272 = vpack.c.b16 %v269, %v268
        %v273 = vpack.c.b16 %v271, %v270
        %276 = vmatpush.bf16.msra.mxu0 0
        %277 = vmatpush.bf16.msra.mxu0 0
        %278 = vmatpush.bf16.msra.mxu0 0
        %279 = vmatpush.bf16.msra.mxu0 0
        %280 = vmatpush.bf16.msra.mxu0 0
        %281 = vmatpush.bf16.msra.mxu0 0
        %282 = vmatpush.bf16.msra.mxu0 %v273
        %283 = vmatpush.bf16.msra.mxu0 %v272
        %284 = vmatmul.bf16.gmra.mxu0 %v232
        %v285 = vpop.f32.mrf.mxu0
        %v286 = vadd.f32 0.0, %v285
        %v287 = vpop.f32.mrf.mxu0
        %288 = vdwg.mxu0
        %v289 = vpack.c.bf16 %v286, %v286
        %s290 = scalar_lea.vmem %s192, 4 [#allocation2]
        %291 = vst.msk [vmem:[%s290] sm:$0xf] %vm248, %v289
        %293 = vrot.lane.b32.xlu0 %v289, 120
        %v294 = vpop.permute.xlu0 %293
        %s296 = scalar_lea.vmem %s199, 4 [#allocation4]
        %297 = vst.msk [vmem:[%s296] sm:$0xf] %vm248, %v294
        %298 = vrot.lane.b32.xlu0 %v289, 112
        %v299 = vpop.permute.xlu0 %298
        %s301 = scalar_lea.vmem %s206, 4 [#allocation6]
        %302 = vst.msk [vmem:[%s301] sm:$0xf] %vm248, %v299
        %s303 = scalar_lea.vmem %s1, 32
        %v304 = vld [vmem:[%s303] sm:$0xf]
        %v305 = vld [vmem:[%s303 + $0x4] sm:$0xf]
        %v306 = vld [vmem:[%s303 + $0x8] sm:$0xf]
        %v307 = vld [vmem:[%s303 + $0xc] sm:$0xf]
        %v312 = vunpack.c.l.b16 %v304
        %v313 = vunpack.c.l.b16 %v305
        %v314 = vunpack.c.l.b16 %v306
        %v315 = vunpack.c.l.b16 %v307
        %v316 = vpack.c.b16 %v313, %v312
        %v317 = vpack.c.b16 %v315, %v314
        %320 = vmatpush.bf16.msra.mxu0 0
        %321 = vmatpush.bf16.msra.mxu0 0
        %322 = vmatpush.bf16.msra.mxu0 0
        %323 = vmatpush.bf16.msra.mxu0 0
        %324 = vmatpush.bf16.msra.mxu0 0
        %325 = vmatpush.bf16.msra.mxu0 0
        %326 = vmatpush.bf16.msra.mxu0 %v317
        %327 = vmatpush.bf16.msra.mxu0 %v316
        %328 = vmatmul.bf16.gmra.mxu0 %v232
        %v329 = vpop.f32.mrf.mxu0
        %v330 = vadd.f32 0.0, %v329
        %v331 = vpop.f32.mrf.mxu0
        %332 = vdwg.mxu0
        %v333 = vpack.c.bf16 %v330, %v330
        %s334 = scalar_lea.vmem %s192, 8 [#allocation2]
        %335 = vst.msk [vmem:[%s334] sm:$0xf] %vm248, %v333
        %337 = vrot.lane.b32.xlu0 %v333, 120
        %v338 = vpop.permute.xlu0 %337
        %s340 = scalar_lea.vmem %s199, 8 [#allocation4]
        %341 = vst.msk [vmem:[%s340] sm:$0xf] %vm248, %v338
        %342 = vrot.lane.b32.xlu0 %v333, 112
        %v343 = vpop.permute.xlu0 %342
        %s345 = scalar_lea.vmem %s206, 8 [#allocation6]
        %346 = vst.msk [vmem:[%s345] sm:$0xf] %vm248, %v343
        %s347 = scalar_lea.vmem %s1, 48
        %v348 = vld [vmem:[%s347] sm:$0xf]
        %v349 = vld [vmem:[%s347 + $0x4] sm:$0xf]
        %v350 = vld [vmem:[%s347 + $0x8] sm:$0xf]
        %v351 = vld [vmem:[%s347 + $0xc] sm:$0xf]
        %v356 = vunpack.c.l.b16 %v348
        %v357 = vunpack.c.l.b16 %v349
        %v358 = vunpack.c.l.b16 %v350
        %v359 = vunpack.c.l.b16 %v351
        %v360 = vpack.c.b16 %v357, %v356
        %v361 = vpack.c.b16 %v359, %v358
        %364 = vmatpush.bf16.msra.mxu0 0
        %365 = vmatpush.bf16.msra.mxu0 0
        %366 = vmatpush.bf16.msra.mxu0 0
        %367 = vmatpush.bf16.msra.mxu0 0
        %368 = vmatpush.bf16.msra.mxu0 0
        %369 = vmatpush.bf16.msra.mxu0 0
        %370 = vmatpush.bf16.msra.mxu0 %v361
        %371 = vmatpush.bf16.msra.mxu0 %v360
        %372 = vmatmul.bf16.gmra.mxu0 %v232
        %v373 = vpop.f32.mrf.mxu0
        %v374 = vadd.f32 0.0, %v373
        %v375 = vpop.f32.mrf.mxu0
        %376 = vdwg.mxu0
        %v377 = vpack.c.bf16 %v374, %v374
        %s378 = scalar_lea.vmem %s192, 12 [#allocation2]
        %379 = vst.msk [vmem:[%s378] sm:$0xf] %vm248, %v377
        %381 = vrot.lane.b32.xlu0 %v377, 120
        %v382 = vpop.permute.xlu0 %381
        %s384 = scalar_lea.vmem %s199, 12 [#allocation4]
        %385 = vst.msk [vmem:[%s384] sm:$0xf] %vm248, %v382
        %386 = vrot.lane.b32.xlu0 %v377, 112
        %v387 = vpop.permute.xlu0 %386
        %s389 = scalar_lea.vmem %s206, 12 [#allocation6]
        %390 = vst.msk [vmem:[%s389] sm:$0xf] %vm248, %v387
        %s391 = sand.u32 %s77, 1
        %s392 = scalar_lea.sflag [#allocation3], %s391
        %s393 = sand.u32 %s77, 1
        %s394 = smul.addr %s393, 16
        %s395 = scalar_lea.vmem [#allocation2], %s394
        %s396 = sand.u32 %s22, 1
        %s397 = scalar_lea.sflag [#allocation5], %s396
        %s398 = sand.u32 %s103, 1
        %s399 = smul.addr %s398, 16
        %s400 = scalar_lea.vmem [#allocation4], %s399
        %s401 = sand.u32 %s22, 1
        %s402 = scalar_lea.sflag [#allocation5], %s401
        %s403 = sand.u32 %s129, 1
        %s404 = smul.addr %s403, 16
        %s405 = scalar_lea.vmem [#allocation6], %s404
        // Predicated region
        $region29: #{tpu_custom_call.1} parent=27 // pred_check
          %p406 = pneg %p87
        $region30: #{tpu_custom_call.1} parent=27 // pred_check_branch
          %408 = sbr.rel (%p406) target = $region32
        $region31: #{tpu_custom_call.1} parent=27 // pred_region
          %410 = vsyncadd %s392, 0
          %s411 = smul.addr %s22, 4
          %s412 = scalar_lea.hbm %s2, %s411
          %s413 = sshll.u32 %s395, 4
          %s414 = int_to_ptr.vmem [resolvable:$true] %s413
          %s415 = sshll.u32 %s412, 4
          %s416 = int_to_ptr.hbm [resolvable:$true] %s415
          %421 = dma.vmem_to_hbm [thread:$0]  %s414, 256, %s416, %s392, 64, 128, 4
        $region32: #{tpu_custom_call.1} parent=27 // pred_fallthru
          _
        // Predicated region
        $region33: #{tpu_custom_call.1} parent=27 // pred_check
          %p422 = pneg %p113
        $region34: #{tpu_custom_call.1} parent=27 // pred_check_branch
          %424 = sbr.rel (%p422) target = $region36
        $region35: #{tpu_custom_call.1} parent=27 // pred_region
          %426 = vsyncadd %s397, 0
          %s427 = smul.addr %s22, 4
          %s428 = scalar_lea.hbm %s3, %s427
          %s429 = sshll.u32 %s400, 4
          %s430 = int_to_ptr.vmem [resolvable:$true] %s429
          %s431 = sshll.u32 %s428, 4
          %s432 = int_to_ptr.hbm [resolvable:$true] %s431
          %437 = dma.vmem_to_hbm [thread:$0]  %s430, 256, %s432, %s397, 64, 128, 4
        $region36: #{tpu_custom_call.1} parent=27 // pred_fallthru
          _
        // Predicated region
        $region37: #{tpu_custom_call.1} parent=27 // pred_check
          %p438 = pneg %p139
        $region38: #{tpu_custom_call.1} parent=27 // pred_check_branch
          %440 = sbr.rel (%p438) target = $region40
        $region39: #{tpu_custom_call.1} parent=27 // pred_region
          %442 = vsyncadd %s402, 0
          %s443 = smul.addr %s22, 4
          %s444 = scalar_lea.hbm %s4, %s443
          %s445 = sshll.u32 %s405, 4
          %s446 = int_to_ptr.vmem [resolvable:$true] %s445
          %s447 = sshll.u32 %s444, 4
          %s448 = int_to_ptr.hbm [resolvable:$true] %s447
          %453 = dma.vmem_to_hbm [thread:$0]  %s446, 256, %s448, %s402, 64, 128, 4
        $region40: #{tpu_custom_call.1} parent=27 // pred_fallthru
          _
      $region28: #{tpu_custom_call.1} parent=5 // pred_fallthru
        _
      %p454 = scmp.le.s32.totalorder 2, %s17
      // Predicated region
      $region41: #{tpu_custom_call.1} parent=5 // pred_check
        %p455 = pneg %p454
      $region42: #{tpu_custom_call.1} parent=5 // pred_check_branch
        %457 = sbr.rel (%p455) target = $region44
      $region43: #{tpu_custom_call.1} parent=5 // pred_region
        %s458 = ssub.s32 %s17, 2
        // Predicated region
        $region45: #{tpu_custom_call.1} parent=43 // pred_check
          %p459 = pneg %p93
        $region46: #{tpu_custom_call.1} parent=43 // pred_check_branch
          %461 = sbr.rel (%p459) target = $region48
        $region47: #{tpu_custom_call.1} parent=43 // pred_region
          %s462 = sand.u32 %s78, 1
          %s463 = scalar_lea.sflag [#allocation3], %s462
          %s464 = sand.u32 %s78, 1
          %s465 = smul.addr %s464, 16
          %s466 = scalar_lea.vmem [#allocation2], %s465
          %468 = dma.done %s463, 256
        $region48: #{tpu_custom_call.1} parent=43 // pred_fallthru
          _
        // Predicated region
        $region49: #{tpu_custom_call.1} parent=43 // pred_check
          %p469 = pneg %p119
        $region50: #{tpu_custom_call.1} parent=43 // pred_check_branch
          %471 = sbr.rel (%p469) target = $region52
        $region51: #{tpu_custom_call.1} parent=43 // pred_region
          %s472 = sand.u32 %s23, 1
          %s473 = scalar_lea.sflag [#allocation5], %s472
          %s474 = sand.u32 %s104, 1
          %s475 = smul.addr %s474, 16
          %s476 = scalar_lea.vmem [#allocation4], %s475
          %478 = dma.done %s473, 256
        $region52: #{tpu_custom_call.1} parent=43 // pred_fallthru
          _
        // Predicated region
        $region53: #{tpu_custom_call.1} parent=43 // pred_check
          %p479 = pneg %p145
        $region54: #{tpu_custom_call.1} parent=43 // pred_check_branch
          %481 = sbr.rel (%p479) target = $region56
        $region55: #{tpu_custom_call.1} parent=43 // pred_region
          %s482 = sand.u32 %s23, 1
          %s483 = scalar_lea.sflag [#allocation5], %s482
          %s484 = sand.u32 %s130, 1
          %s485 = smul.addr %s484, 16
          %s486 = scalar_lea.vmem [#allocation6], %s485
          %488 = dma.done %s483, 256
        $region56: #{tpu_custom_call.1} parent=43 // pred_fallthru
          _
      $region44: #{tpu_custom_call.1} parent=5 // pred_fallthru
        _
    $region6: #{tpu_custom_call.1} parent=1 // loop_footer
      %s21 = sadd.s32 1, %s17
    $region7: #{tpu_custom_call.1} parent=1 // loop_footer_branch
      %16 = sbr.rel target = $region3
    $region8: #{tpu_custom_call.1} parent=1 // loop_exit
      _
    %489 = vsyncpa [#allocation3], 1
    %s490 = scalar_lea.sflag [#allocation3], 1
    %491 = vsyncpa %s490, 1
    %492 = vsyncpa [#allocation5], 1
    %s493 = scalar_lea.sflag [#allocation5], 1
    %494 = vsyncpa %s493, 1

</llo_original>
